<compile_context>
chip_gen: v5e
topology: v5e:2x2
jax: 0.10.0
libtpu: 0.0.40
codegen_flags: <defaults>
</compile_context>

<pallas_src>
import jax
import jax.numpy as jnp
from jax.experimental import pallas as pl
from jax.experimental.pallas import tpu as pltpu


def _sigmoid(v):
    # sigmoid(x) == 0.5*tanh(0.5*x) + 0.5 : one EUP push, mul/add ride in VALU slots.
    return 0.5 * jnp.tanh(0.5 * v) + 0.5


def _decoder_kernel(x_ref, w1_ref, b1_ref, w2_ref, b2_ref, w3_ref, b3_ref, o_ref):
    # x_ref : (TB, 1) f32 VMEM            w1_ref, b1_ref : (1, 1) f32 SMEM scalars
    # w2_ref, b2_ref : (1, 128) f32 VMEM  w3_ref : (128, NP) f32  b3_ref : (1, NP)
    x = x_ref[...]                                            # (TB, 1)

    # Sigmoid -> Linear(num_classes=1, 1) -> Sigmoid : pure VPU/EUP scalar math
    # (the K=1 matmul is a scalar multiply-add; no MXU round trip).
    s = _sigmoid(_sigmoid(x) * w1_ref[0, 0] + b1_ref[0, 0])   # (TB, 1)

    # Linear(1, 128) as a (TB,1)*(1,128) VPU broadcast (second K=1 matmul removed).
    h = s * w2_ref[...] + b2_ref[...]                         # (TB, 128)
    h = jnp.maximum(h, 0.0)                                   # ReLU

    # Linear(128, num_dim_padded): the only real matmul -> MXU, f32 accumulate,
    # lane-dense store (NP % 128 == 0).
    out = jnp.dot(h, w3_ref[...], preferred_element_type=jnp.float32) + b3_ref[...]
    o_ref[...] = out.astype(o_ref.dtype)


def decoder_forward(x, params, *, block_batch=1024):
    """x: (B, num_classes) float32.  params: transposed weights (see init_params)."""
    w1, b1 = params["w1t"], params["b1"]          # (1, 1), (1, 1)
    w2, b2 = params["w2t"], params["b2"]          # (1, 128), (1, 128)
    w3, b3 = params["w3t"], params["b3"]          # (128, num_dim), (1, num_dim)

    batch, num_classes = x.shape
    assert num_classes == 1, "Decoder Sequential is only shape-consistent for num_classes == 1"
    hidden = w2.shape[1]                          # 128
    num_dim = w3.shape[1]

    # Pad the output feature dim to a lane multiple so in-kernel stores are
    # dense vst (not masked vst.msk) and the MXU output columns are used.
    np_dim = 128 * pl.cdiv(num_dim, 128)
    if np_dim != num_dim:
        w3 = jnp.pad(w3, ((0, 0), (0, np_dim - num_dim)))
        b3 = jnp.pad(b3, ((0, 0), (0, np_dim - num_dim)))

    # Batch tile: multiple of 8 sublanes, capped by the batch size.
    tb = max(8, min(block_batch, batch))
    tb = (tb // 8) * 8
    grid = (pl.cdiv(batch, tb),)

    smem = pltpu.MemorySpace.SMEM

    out_padded = pl.pallas_call(
        _decoder_kernel,
        out_shape=jax.ShapeDtypeStruct((batch, np_dim), x.dtype),
        grid_spec=pltpu.PrefetchScalarGridSpec(
            num_scalar_prefetch=0,
            grid=grid,
            in_specs=[
                pl.BlockSpec((tb, 1), lambda i: (i, 0)),            # x tile
                pl.BlockSpec(memory_space=smem),                    # w1 scalar
                pl.BlockSpec(memory_space=smem),                    # b1 scalar
                pl.BlockSpec((1, hidden), lambda i: (0, 0)),        # w2 (resident)
                pl.BlockSpec((1, hidden), lambda i: (0, 0)),        # b2 (resident)
                pl.BlockSpec((hidden, np_dim), lambda i: (0, 0)),   # w3 (resident)
                pl.BlockSpec((1, np_dim), lambda i: (0, 0)),        # b3 (resident)
            ],
            out_specs=pl.BlockSpec((tb, np_dim), lambda i: (i, 0)),
        ),
        compiler_params=pltpu.CompilerParams(
            dimension_semantics=("parallel",),     # batch tiles shard over v7x's 2 TCs
            vmem_limit_bytes=32 * 1024 * 1024,     # explicit; safe within v7x's 64 MiB
        ),
    )(x, w1, b1, w2, b2, w3, b3)

    if np_dim != num_dim:
        return out_padded[:, :num_dim]
    return out_padded


def init_params(key, num_dims, num_classes):
    """Deterministic synthetic init (PyTorch-Linear shapes, stored transposed)."""
    num_dim = 1
    for d in num_dims:
        num_dim *= int(d)

    k1, k2, k3, k4, k5, k6 = jax.random.split(key, 6)

    def uinit(k, shape, fan_in):
        bound = 1.0 / jnp.sqrt(jnp.float32(fan_in))
        return jax.random.uniform(k, shape, jnp.float32, -bound, bound)

    # Linear(num_classes, 1): torch weight (1, num_classes) -> stored (num_classes, 1)
    w1t = uinit(k1, (num_classes, 1), num_classes)
    b1 = uinit(k2, (1, 1), num_classes)
    # Linear(num_classes, 128): torch weight (128, num_classes) -> (num_classes, 128)
    w2t = uinit(k3, (num_classes, 128), num_classes)
    b2 = uinit(k4, (1, 128), num_classes)
    # Linear(128, num_dim): torch weight (num_dim, 128) -> (128, num_dim)
    w3t = uinit(k5, (128, num_dim), 128)
    b3 = uinit(k6, (1, num_dim), 128)

    return {"w1t": w1t, "b1": b1, "w2t": w2t, "b2": b2, "w3t": w3t, "b3": b3}


def decoder_reference(x, params):
    """Plain-JAX reference mirroring the PyTorch forward."""
    h = jax.nn.sigmoid(x)
    h = h @ params["w1t"] + params["b1"]
    h = jax.nn.sigmoid(h)
    h = h @ params["w2t"] + params["b2"]
    h = jnp.maximum(h, 0.0)
    return h @ params["w3t"] + params["b3"]


if __name__ == "__main__":
    key = jax.random.PRNGKey(0)
    k_params, k_x, k_params2, k_x2 = jax.random.split(key, 4)

    num_classes = 1  # required for the Sequential to be shape-consistent

    # Case 1: num_dim = 8 (output padded to 128 lanes inside), 4 batch tiles.
    params = init_params(k_params, (8,), num_classes)
    x = jax.random.normal(k_x, (512, num_classes), jnp.float32)
    out = jax.block_until_ready(decoder_forward(x, params, block_batch=128))
    ref = decoder_reference(x, params)
    assert out.shape == (512, 8)
    assert jnp.allclose(out, ref, atol=2e-5, rtol=2e-5)

    # Case 2: num_dim = 128 (naturally lane-dense output), single batch tile.
    params2 = init_params(k_params2, (16, 8), num_classes)
    x2 = jax.random.normal(k_x2, (256, num_classes), jnp.float32)
    out2 = jax.block_until_ready(decoder_forward(x2, params2, block_batch=256))
    ref2 = decoder_reference(x2, params2)
    assert out2.shape == (256, 128)
    assert jnp.allclose(out2, ref2, atol=2e-5, rtol=2e-5)

    print("KERNEL_OK")
</pallas_src>

<mosaic_0001>
module attributes {stable_mosaic.version = 11 : i64} {
  func.func @_decoder_kernel(%arg0: i32, %arg1: memref<128x1xf32, #tpu.memory_space<vmem>>, %arg2: memref<1x1xf32, #tpu.memory_space<smem>>, %arg3: memref<1x1xf32, #tpu.memory_space<smem>>, %arg4: memref<1x128xf32, #tpu.memory_space<vmem>>, %arg5: memref<1x128xf32, #tpu.memory_space<vmem>>, %arg6: memref<128x128xf32, #tpu.memory_space<vmem>>, %arg7: memref<1x128xf32, #tpu.memory_space<vmem>>, %arg8: memref<128x128xf32, #tpu.memory_space<vmem>>) attributes {dimension_semantics = [#tpu.dimension_semantics<parallel>], iteration_bounds = array<i64: 4>, scalar_prefetch = 0 : i64, scratch_operands = 0 : i64, tpu.core_type = #tpu.core_type<tc>, window_params = [{transform_indices = @transform_0, window_bounds = array<i64: 128, 1>}, {transform_indices = @transform_1, window_bounds = array<i64: 1, 1>}, {transform_indices = @transform_2, window_bounds = array<i64: 1, 1>}, {pipeline_mode = #tpu.pipeline_mode<synchronous>, transform_indices = @transform_3, window_bounds = array<i64: 1, 128>}, {pipeline_mode = #tpu.pipeline_mode<synchronous>, transform_indices = @transform_4, window_bounds = array<i64: 1, 128>}, {pipeline_mode = #tpu.pipeline_mode<synchronous>, transform_indices = @transform_5, window_bounds = array<i64: 128, 128>}, {pipeline_mode = #tpu.pipeline_mode<synchronous>, transform_indices = @transform_6, window_bounds = array<i64: 1, 128>}, {transform_indices = @transform_7, window_bounds = array<i64: 128, 128>}]} {
    %c0 = arith.constant 0 : index
    %c0_0 = arith.constant 0 : index
    %0 = vector.load %arg1[%c0, %c0_0] : memref<128x1xf32, #tpu.memory_space<vmem>>, vector<128x1xf32>
    %cst = arith.constant 5.000000e-01 : f32
    %1 = vector.broadcast %cst : f32 to vector<128x1xf32>
    %2 = arith.mulf %1, %0 : vector<128x1xf32>
    %3 = math.tanh %2 : vector<128x1xf32>
    %cst_1 = arith.constant 5.000000e-01 : f32
    %4 = vector.broadcast %cst_1 : f32 to vector<128x1xf32>
    %5 = arith.mulf %4, %3 : vector<128x1xf32>
    %cst_2 = arith.constant 5.000000e-01 : f32
    %6 = vector.broadcast %cst_2 : f32 to vector<128x1xf32>
    %7 = arith.addf %5, %6 : vector<128x1xf32>
    %c0_3 = arith.constant 0 : index
    %c0_4 = arith.constant 0 : index
    %8 = memref.load %arg2[%c0_3, %c0_4] : memref<1x1xf32, #tpu.memory_space<smem>>
    %9 = vector.broadcast %8 : f32 to vector<128x1xf32>
    %10 = arith.mulf %7, %9 : vector<128x1xf32>
    %c0_5 = arith.constant 0 : index
    %c0_6 = arith.constant 0 : index
    %11 = memref.load %arg3[%c0_5, %c0_6] : memref<1x1xf32, #tpu.memory_space<smem>>
    %12 = vector.broadcast %11 : f32 to vector<128x1xf32>
    %13 = arith.addf %10, %12 : vector<128x1xf32>
    %cst_7 = arith.constant 5.000000e-01 : f32
    %14 = vector.broadcast %cst_7 : f32 to vector<128x1xf32>
    %15 = arith.mulf %14, %13 : vector<128x1xf32>
    %16 = math.tanh %15 : vector<128x1xf32>
    %cst_8 = arith.constant 5.000000e-01 : f32
    %17 = vector.broadcast %cst_8 : f32 to vector<128x1xf32>
    %18 = arith.mulf %17, %16 : vector<128x1xf32>
    %cst_9 = arith.constant 5.000000e-01 : f32
    %19 = vector.broadcast %cst_9 : f32 to vector<128x1xf32>
    %20 = arith.addf %18, %19 : vector<128x1xf32>
    %c0_10 = arith.constant 0 : index
    %c0_11 = arith.constant 0 : index
    %21 = vector.load %arg4[%c0_10, %c0_11] : memref<1x128xf32, #tpu.memory_space<vmem>>, vector<1x128xf32>
    %22 = vector.broadcast %20 : vector<128x1xf32> to vector<128x128xf32>
    %23 = vector.broadcast %21 : vector<1x128xf32> to vector<128x128xf32>
    %24 = arith.mulf %22, %23 : vector<128x128xf32>
    %c0_12 = arith.constant 0 : index
    %c0_13 = arith.constant 0 : index
    %25 = vector.load %arg5[%c0_12, %c0_13] : memref<1x128xf32, #tpu.memory_space<vmem>>, vector<1x128xf32>
    %26 = vector.broadcast %25 : vector<1x128xf32> to vector<128x128xf32>
    %27 = arith.addf %24, %26 : vector<128x128xf32>
    %cst_14 = arith.constant 0.000000e+00 : f32
    %28 = vector.broadcast %cst_14 : f32 to vector<128x128xf32>
    %29 = arith.maximumf %27, %28 : vector<128x128xf32>
    %c0_15 = arith.constant 0 : index
    %c0_16 = arith.constant 0 : index
    %30 = vector.load %arg6[%c0_15, %c0_16] : memref<128x128xf32, #tpu.memory_space<vmem>>, vector<128x128xf32>
    %cst_17 = arith.constant dense<0.000000e+00> : vector<128x128xf32>
    %31 = tpu.matmul %29, %30, %cst_17 {dimension_numbers = #tpu.dot_dimension_numbers<[1], [0], [0], [1], [0, 0, 1, 1], [], []>} : vector<128x128xf32>, vector<128x128xf32>, vector<128x128xf32> -> vector<128x128xf32>
    %c0_18 = arith.constant 0 : index
    %c0_19 = arith.constant 0 : index
    %32 = vector.load %arg7[%c0_18, %c0_19] : memref<1x128xf32, #tpu.memory_space<vmem>>, vector<1x128xf32>
    %33 = vector.broadcast %32 : vector<1x128xf32> to vector<128x128xf32>
    %34 = arith.addf %31, %33 : vector<128x128xf32>
    %c0_20 = arith.constant 0 : index
    %c0_21 = arith.constant 0 : index
    %35 = vector.load %arg8[%c0_20, %c0_21] : memref<128x128xf32, #tpu.memory_space<vmem>>, vector<128x128xf32>
    tpu.vector_store %arg8[%c0_20, %c0_21], %34 {strides = array<i32>} : memref<128x128xf32, #tpu.memory_space<vmem>>, vector<128x128xf32>,
    return
  }
  func.func @transform_0(%arg0: i32) -> (i32, i32) {
    %c0_i32 = arith.constant 0 : i32
    %c0_i32_0 = arith.constant 0 : i32
    return %arg0, %c0_i32 : i32, i32
  }
  func.func @transform_1(%arg0: i32) -> (i32, i32) {
    %c0_i32 = arith.constant 0 : i32
    %c0_i32_0 = arith.constant 0 : i32
    %c0_i32_1 = arith.constant 0 : i32
    return %c0_i32, %c0_i32_0 : i32, i32
  }
  func.func @transform_2(%arg0: i32) -> (i32, i32) {
    %c0_i32 = arith.constant 0 : i32
    %c0_i32_0 = arith.constant 0 : i32
    %c0_i32_1 = arith.constant 0 : i32
    return %c0_i32, %c0_i32_0 : i32, i32
  }
  func.func @transform_3(%arg0: i32) -> (i32, i32) {
    %c0_i32 = arith.constant 0 : i32
    %c0_i32_0 = arith.constant 0 : i32
    %c0_i32_1 = arith.constant 0 : i32
    return %c0_i32, %c0_i32_0 : i32, i32
  }
  func.func @transform_4(%arg0: i32) -> (i32, i32) {
    %c0_i32 = arith.constant 0 : i32
    %c0_i32_0 = arith.constant 0 : i32
    %c0_i32_1 = arith.constant 0 : i32
    return %c0_i32, %c0_i32_0 : i32, i32
  }
  func.func @transform_5(%arg0: i32) -> (i32, i32) {
    %c0_i32 = arith.constant 0 : i32
    %c0_i32_0 = arith.constant 0 : i32
    %c0_i32_1 = arith.constant 0 : i32
    return %c0_i32, %c0_i32_0 : i32, i32
  }
  func.func @transform_6(%arg0: i32) -> (i32, i32) {
    %c0_i32 = arith.constant 0 : i32
    %c0_i32_0 = arith.constant 0 : i32
    %c0_i32_1 = arith.constant 0 : i32
    return %c0_i32, %c0_i32_0 : i32, i32
  }
  func.func @transform_7(%arg0: i32) -> (i32, i32) {
    %c0_i32 = arith.constant 0 : i32
    %c0_i32_0 = arith.constant 0 : i32
    return %arg0, %c0_i32 : i32, i32
  }
}

</mosaic_0001>

<llo_original>
// kernel: tpu_custom_call.1
$region0: #{tpu_custom_call.1}
  #allocation0 [shape = 'u32[]', space=smem, size = 0x4, offset = 0x4, fixed_abs, tag = 'smem constant byte address 0x4 - core index']
  #allocation1 [shape = 'u32[72,128]{1,0:T(1,128)}', space=vmem, size = 0x9000, scoped, tag = 'internal scratch']
  #allocation2 [shape = 'f32[1,1]{1,0:T(1,128)S(6)}', space=smem, size = 0x200, scoped, tag = 'scoped memory for tpu_custom_call.1']
  #allocation3 [shape = 'f32[1,1]{1,0:T(1,128)S(6)}', space=smem, size = 0x200, scoped, tag = 'scoped memory for tpu_custom_call.1']
  %s0 = inlined_call_operand.vmem [shape: f32[512,1], index: 0, kind: input, shape index: {}]
  %s1 = inlined_call_operand.<no memory space> [shape: f32[1,1], index: 1, kind: input, shape index: {}]
  %s2 = inlined_call_operand.<no memory space> [shape: f32[1,1], index: 2, kind: input, shape index: {}]
  %s3 = inlined_call_operand.vmem [shape: f32[1,128], index: 3, kind: input, shape index: {}]
  %s4 = inlined_call_operand.vmem [shape: f32[1,128], index: 4, kind: input, shape index: {}]
  %s5 = inlined_call_operand.vmem [shape: f32[128,128], index: 5, kind: input, shape index: {}]
  %s6 = inlined_call_operand.vmem [shape: f32[1,128], index: 6, kind: input, shape index: {}]
  %s7 = inlined_call_operand.hbm [shape: f32[512,128], index: 7, kind: output, shape index: {}]
  %s8 = sld [smem:[#allocation0]]
  $region61: #{tpu_custom_call.1} parent=0
    _
  %s10 = ssub.s32 1, %s8
  %s11 = scalar_select 0, %s10, %s8
  %12 = sst [smem:[#allocation2]] %s1
  %13 = sst [smem:[#allocation3]] %s2
  $region1: #{tpu_custom_call.1} parent=0
    #allocation4 [shape = 'u8[131072]{0}', space=vmem, size = 0x20000, scoped, tag = 'output window, operand 0']
    #allocation5 [shape = 's32[2]{0}', space=sflag, size = 0x8, scoped, tag = 'scoped memory for tpu_custom_call.1']
    %14 = vsyncpa [#allocation5], 0
    %s15 = scalar_lea.sflag [#allocation5], 1
    %16 = vsyncpa %s15, 0
    loop: start=0, step=1, limit=6
    $region2: #{tpu_custom_call.1} parent=1 // loop_pre_header
      _
    $region3: #{tpu_custom_call.1} parent=1 // loop_header
      %s18 = sphi 0, %s22
      %p19 = scmp.ge.s32.totalorder %s18, 6
      %s28 = sphi 0, %s30
      %s31 = sphi 0, %s28
      %s32 = sphi 0, %s31
      %s48 = sphi 0, %s32
      %s52 = sphi 0, %s52
      %s54 = sphi 0, %s52
      %s55 = sphi 0, %s54
      %s69 = sphi 0, %s55
      %s73 = sphi 0, %s73
      %s75 = sphi 0, %s73
      %s76 = sphi 0, %s75
      %s90 = sphi 0, %s76
      %s94 = sphi 0, %s94
      %s96 = sphi 0, %s94
      %s97 = sphi 0, %s96
      %s111 = sphi 0, %s97
      %s115 = sphi 0, %s115
      %s117 = sphi 0, %s115
      %s118 = sphi 0, %s117
      %s132 = sphi 0, %s118
      %s136 = sphi 0, %s136
      %s138 = sphi 0, %s136
      %s139 = sphi 0, %s138
      %s153 = sphi 0, %s139
      %s157 = sphi 0, %s157
      %s159 = sphi 0, %s157
      %s160 = sphi 0, %s159
      %s174 = sphi 0, %s160
      %s180 = sphi 0, %s182
      %s183 = sphi 0, %s180
      %s184 = sphi 0, %s183
      %s200 = sphi 0, %s184
    $region4: #{tpu_custom_call.1} parent=1 // loop_header_branch
      %21 = sbr.rel (%p19) target = $region8
    $region5: #{tpu_custom_call.1} parent=1 // loop_body
      %s23 = ssub.s32 %s18, 1
      %s24 = ssub.s32 %s18, 2
      %s25 = sadd.s32 %s18, 1
      %s26 = ssub.s32 %s18, %s25
      %p27 = scmp.eq.s32.totalorder %s26, 0
      %s29 = sadd.s32 %s28, 1
      %s30 = scalar_select %p27, %s28, %s29
      %p33 = pneg %p27
      %p34 = scmp.eq.s32.totalorder %s18, 3
      %p35 = por %p33, %p34
      %p36 = scmp.ne.s32.totalorder %s28, %s31
      %p37 = scmp.eq.s32.totalorder %s18, 0
      %p38 = por %p36, %p37
      %p39 = scmp.ne.s32.totalorder %s28, %s31
      %p40 = scmp.eq.s32.totalorder %s23, 3
      %p41 = por %p39, %p40
      %p42 = scmp.ne.s32.totalorder %s31, %s32
      %p43 = scmp.eq.s32.totalorder %s23, 0
      %p44 = por %p42, %p43
      %p45 = scmp.ne.s32.totalorder %s31, %s32
      %p46 = scmp.eq.s32.totalorder %s24, 3
      %p47 = por %p45, %p46
      %p49 = scmp.ne.s32.totalorder %s32, %s48
      %p50 = scmp.eq.s32.totalorder %s24, 0
      %p51 = por %p49, %p50
      %s53 = sadd.s32 %s52, 1
      %p56 = scmp.eq.s32.totalorder %s18, 3
      %p57 = scmp.ne.s32.totalorder %s52, %s54
      %p58 = scmp.eq.s32.totalorder %s18, 0
      %p59 = por %p57, %p58
      %p60 = scmp.ne.s32.totalorder %s52, %s54
      %p61 = scmp.eq.s32.totalorder %s23, 3
      %p62 = por %p60, %p61
      %p63 = scmp.ne.s32.totalorder %s54, %s55
      %p64 = scmp.eq.s32.totalorder %s23, 0
      %p65 = por %p63, %p64
      %p66 = scmp.ne.s32.totalorder %s54, %s55
      %p67 = scmp.eq.s32.totalorder %s24, 3
      %p68 = por %p66, %p67
      %p70 = scmp.ne.s32.totalorder %s55, %s69
      %p71 = scmp.eq.s32.totalorder %s24, 0
      %p72 = por %p70, %p71
      %s74 = sadd.s32 %s73, 1
      %p77 = scmp.eq.s32.totalorder %s18, 3
      %p78 = scmp.ne.s32.totalorder %s73, %s75
      %p79 = scmp.eq.s32.totalorder %s18, 0
      %p80 = por %p78, %p79
      %p81 = scmp.ne.s32.totalorder %s73, %s75
      %p82 = scmp.eq.s32.totalorder %s23, 3
      %p83 = por %p81, %p82
      %p84 = scmp.ne.s32.totalorder %s75, %s76
      %p85 = scmp.eq.s32.totalorder %s23, 0
      %p86 = por %p84, %p85
      %p87 = scmp.ne.s32.totalorder %s75, %s76
      %p88 = scmp.eq.s32.totalorder %s24, 3
      %p89 = por %p87, %p88
      %p91 = scmp.ne.s32.totalorder %s76, %s90
      %p92 = scmp.eq.s32.totalorder %s24, 0
      %p93 = por %p91, %p92
      %s95 = sadd.s32 %s94, 1
      %p98 = scmp.eq.s32.totalorder %s18, 3
      %p99 = scmp.ne.s32.totalorder %s94, %s96
      %p100 = scmp.eq.s32.totalorder %s18, 0
      %p101 = por %p99, %p100
      %p102 = scmp.ne.s32.totalorder %s94, %s96
      %p103 = scmp.eq.s32.totalorder %s23, 3
      %p104 = por %p102, %p103
      %p105 = scmp.ne.s32.totalorder %s96, %s97
      %p106 = scmp.eq.s32.totalorder %s23, 0
      %p107 = por %p105, %p106
      %p108 = scmp.ne.s32.totalorder %s96, %s97
      %p109 = scmp.eq.s32.totalorder %s24, 3
      %p110 = por %p108, %p109
      %p112 = scmp.ne.s32.totalorder %s97, %s111
      %p113 = scmp.eq.s32.totalorder %s24, 0
      %p114 = por %p112, %p113
      %s116 = sadd.s32 %s115, 1
      %p119 = scmp.eq.s32.totalorder %s18, 3
      %p120 = scmp.ne.s32.totalorder %s115, %s117
      %p121 = scmp.eq.s32.totalorder %s18, 0
      %p122 = por %p120, %p121
      %p123 = scmp.ne.s32.totalorder %s115, %s117
      %p124 = scmp.eq.s32.totalorder %s23, 3
      %p125 = por %p123, %p124
      %p126 = scmp.ne.s32.totalorder %s117, %s118
      %p127 = scmp.eq.s32.totalorder %s23, 0
      %p128 = por %p126, %p127
      %p129 = scmp.ne.s32.totalorder %s117, %s118
      %p130 = scmp.eq.s32.totalorder %s24, 3
      %p131 = por %p129, %p130
      %p133 = scmp.ne.s32.totalorder %s118, %s132
      %p134 = scmp.eq.s32.totalorder %s24, 0
      %p135 = por %p133, %p134
      %s137 = sadd.s32 %s136, 1
      %p140 = scmp.eq.s32.totalorder %s18, 3
      %p141 = scmp.ne.s32.totalorder %s136, %s138
      %p142 = scmp.eq.s32.totalorder %s18, 0
      %p143 = por %p141, %p142
      %p144 = scmp.ne.s32.totalorder %s136, %s138
      %p145 = scmp.eq.s32.totalorder %s23, 3
      %p146 = por %p144, %p145
      %p147 = scmp.ne.s32.totalorder %s138, %s139
      %p148 = scmp.eq.s32.totalorder %s23, 0
      %p149 = por %p147, %p148
      %p150 = scmp.ne.s32.totalorder %s138, %s139
      %p151 = scmp.eq.s32.totalorder %s24, 3
      %p152 = por %p150, %p151
      %p154 = scmp.ne.s32.totalorder %s139, %s153
      %p155 = scmp.eq.s32.totalorder %s24, 0
      %p156 = por %p154, %p155
      %s158 = sadd.s32 %s157, 1
      %p161 = scmp.eq.s32.totalorder %s18, 3
      %p162 = scmp.ne.s32.totalorder %s157, %s159
      %p163 = scmp.eq.s32.totalorder %s18, 0
      %p164 = por %p162, %p163
      %p165 = scmp.ne.s32.totalorder %s157, %s159
      %p166 = scmp.eq.s32.totalorder %s23, 3
      %p167 = por %p165, %p166
      %p168 = scmp.ne.s32.totalorder %s159, %s160
      %p169 = scmp.eq.s32.totalorder %s23, 0
      %p170 = por %p168, %p169
      %p171 = scmp.ne.s32.totalorder %s159, %s160
      %p172 = scmp.eq.s32.totalorder %s24, 3
      %p173 = por %p171, %p172
      %p175 = scmp.ne.s32.totalorder %s160, %s174
      %p176 = scmp.eq.s32.totalorder %s24, 0
      %p177 = por %p175, %p176
      %s178 = ssub.s32 %s18, %s25
      %p179 = scmp.eq.s32.totalorder %s178, 0
      %s181 = sadd.s32 %s180, 1
      %s182 = scalar_select %p179, %s180, %s181
      %p185 = pneg %p179
      %p186 = scmp.eq.s32.totalorder %s18, 3
      %p187 = por %p185, %p186
      %p188 = scmp.ne.s32.totalorder %s180, %s183
      %p189 = scmp.eq.s32.totalorder %s18, 0
      %p190 = por %p188, %p189
      %p191 = scmp.ne.s32.totalorder %s180, %s183
      %p192 = scmp.eq.s32.totalorder %s23, 3
      %p193 = por %p191, %p192
      %p194 = scmp.ne.s32.totalorder %s183, %s184
      %p195 = scmp.eq.s32.totalorder %s23, 0
      %p196 = por %p194, %p195
      %p197 = scmp.ne.s32.totalorder %s183, %s184
      %p198 = scmp.eq.s32.totalorder %s24, 3
      %p199 = por %p197, %p198
      %p201 = scmp.ne.s32.totalorder %s184, %s200
      %p202 = scmp.eq.s32.totalorder %s24, 0
      %p203 = por %p201, %p202
      %p204 = scmp.le.s32.totalorder 1, %s18
      %p205 = scmp.lt.s32.totalorder %s18, 5
      %p206 = pnand %p204, %p205
      %p207 = pneg %p206
      // Predicated region
      $region9: #{tpu_custom_call.1} parent=5 // pred_check
        _
      $region10: #{tpu_custom_call.1} parent=5 // pred_check_branch
        %209 = sbr.rel (%p206) target = $region12
      $region11: #{tpu_custom_call.1} parent=5 // pred_region
        %s210 = ssub.s32 %s18, 1
        // Predicated region
        $region13: #{tpu_custom_call.1} parent=11 // pred_check
          %p211 = pneg %p65
        $region14: #{tpu_custom_call.1} parent=11 // pred_check_branch
          %213 = sbr.rel (%p211) target = $region16
        $region15: #{tpu_custom_call.1} parent=11 // pred_region
          _
        $region16: #{tpu_custom_call.1} parent=11 // pred_fallthru
          _
        // Predicated region
        $region17: #{tpu_custom_call.1} parent=11 // pred_check
          %p214 = pneg %p86
        $region18: #{tpu_custom_call.1} parent=11 // pred_check_branch
          %216 = sbr.rel (%p214) target = $region20
        $region19: #{tpu_custom_call.1} parent=11 // pred_region
          _
        $region20: #{tpu_custom_call.1} parent=11 // pred_fallthru
          _
        // Predicated region
        $region21: #{tpu_custom_call.1} parent=11 // pred_check
          %p217 = pneg %p107
        $region22: #{tpu_custom_call.1} parent=11 // pred_check_branch
          %219 = sbr.rel (%p217) target = $region24
        $region23: #{tpu_custom_call.1} parent=11 // pred_region
          _
        $region24: #{tpu_custom_call.1} parent=11 // pred_fallthru
          _
        // Predicated region
        $region25: #{tpu_custom_call.1} parent=11 // pred_check
          %p220 = pneg %p128
        $region26: #{tpu_custom_call.1} parent=11 // pred_check_branch
          %222 = sbr.rel (%p220) target = $region28
        $region27: #{tpu_custom_call.1} parent=11 // pred_region
          _
        $region28: #{tpu_custom_call.1} parent=11 // pred_fallthru
          _
        // Predicated region
        $region29: #{tpu_custom_call.1} parent=11 // pred_check
          %p223 = pneg %p149
        $region30: #{tpu_custom_call.1} parent=11 // pred_check_branch
          %225 = sbr.rel (%p223) target = $region32
        $region31: #{tpu_custom_call.1} parent=11 // pred_region
          _
        $region32: #{tpu_custom_call.1} parent=11 // pred_fallthru
          _
        // Predicated region
        $region33: #{tpu_custom_call.1} parent=11 // pred_check
          %p226 = pneg %p170
        $region34: #{tpu_custom_call.1} parent=11 // pred_check_branch
          %228 = sbr.rel (%p226) target = $region36
        $region35: #{tpu_custom_call.1} parent=11 // pred_region
          _
        $region36: #{tpu_custom_call.1} parent=11 // pred_fallthru
          _
      $region12: #{tpu_custom_call.1} parent=5 // pred_fallthru
        _
      %p229 = scmp.lt.s32.totalorder %s18, 4
      // Predicated region
      $region37: #{tpu_custom_call.1} parent=5 // pred_check
        %p230 = pneg %p229
      $region38: #{tpu_custom_call.1} parent=5 // pred_check_branch
        %232 = sbr.rel (%p230) target = $region40
      $region39: #{tpu_custom_call.1} parent=5 // pred_region
        // Predicated region
        $region41: #{tpu_custom_call.1} parent=39 // pred_check
          %p233 = pneg %p38
        $region42: #{tpu_custom_call.1} parent=39 // pred_check_branch
          %235 = sbr.rel (%p233) target = $region44
        $region43: #{tpu_custom_call.1} parent=39 // pred_region
          %s236 = smul.u32 16, %s18
          %p237 = scmp.lt.s32.totalorder %s236, 63
          %s238 = scalar_select %p237, %s236, 63
          %s239 = smul.addr %s238, 8
          %s240 = scalar_lea.vmem %s0, %s239
          %s241 = smul.u32 16, %s18
        $region44: #{tpu_custom_call.1} parent=39 // pred_fallthru
          _
      $region40: #{tpu_custom_call.1} parent=5 // pred_fallthru
        _
      %p242 = scmp.le.s32.totalorder 1, %s18
      %p243 = scmp.lt.s32.totalorder %s18, 5
      %p244 = pnand %p242, %p243
      %p245 = pneg %p244
      // Predicated region
      $region45: #{tpu_custom_call.1} parent=5 // pred_check
        _
      $region46: #{tpu_custom_call.1} parent=5 // pred_check_branch
        %247 = sbr.rel (%p244) target = $region48
      $region47: #{tpu_custom_call.1} parent=5 // pred_region
        %s248 = ssub.s32 %s18, 1
        %s249 = smul.u32 16, %s23
        %p250 = scmp.lt.s32.totalorder %s249, 63
        %s251 = scalar_select %p250, %s249, 63
        %s252 = smul.addr %s251, 8
        %s253 = scalar_lea.vmem %s0, %s252
        %p254 = pneg %p44
        %p255 = pneg %p41
        %p256 = pneg %p65
        %p257 = pneg %p62
        %p258 = pneg %p86
        %p259 = pneg %p83
        %p260 = pneg %p107
        %p261 = pneg %p104
        %p262 = pneg %p128
        %p263 = pneg %p125
        %p264 = pneg %p149
        %p265 = pneg %p146
        %p266 = pneg %p170
        %p267 = pneg %p167
        %p268 = pneg %p196
        %p269 = pneg %p193
        %s270 = sand.u32 %s183, 1
        %s271 = scalar_lea.sflag [#allocation5], %s270
        %s272 = sand.u32 %s183, 1
        %s273 = smul.addr %s272, 128
        %s274 = scalar_lea.vmem [#allocation4], %s273
        %s275 = smul.u32 16, %s23
        %p276 = scmp.lt.s32.totalorder %s275, 63
        %s277 = scalar_select %p276, %s275, 63
        %s278 = smul.addr %s277, 8
        %s279 = scalar_lea.vmem %s0, %s278
        %s280 = smul.u32 16, %s23
        %s281 = smul.u32 16, %s23
        %v282 = vld [vmem:[%s279] sm:$0xff]
        %v283 = vld [vmem:[%s279 + $0x8] sm:$0xff]
        %v284 = vld [vmem:[%s279 + $0x10] sm:$0xff]
        %v285 = vld [vmem:[%s279 + $0x18] sm:$0xff]
        %v286 = vld [vmem:[%s279 + $0x20] sm:$0xff]
        %v287 = vld [vmem:[%s279 + $0x28] sm:$0xff]
        %v288 = vld [vmem:[%s279 + $0x30] sm:$0xff]
        %v289 = vld [vmem:[%s279 + $0x38] sm:$0xff]
        %v290 = vld [vmem:[%s279 + $0x40] sm:$0xff]
        %v291 = vld [vmem:[%s279 + $0x48] sm:$0xff]
        %v292 = vld [vmem:[%s279 + $0x50] sm:$0xff]
        %v293 = vld [vmem:[%s279 + $0x58] sm:$0xff]
        %v294 = vld [vmem:[%s279 + $0x60] sm:$0xff]
        %v295 = vld [vmem:[%s279 + $0x68] sm:$0xff]
        %v296 = vld [vmem:[%s279 + $0x70] sm:$0xff]
        %v297 = vld [vmem:[%s279 + $0x78] sm:$0xff]
        %v298 = vmul.f32 %v282, 0.5
        %v299 = vmul.f32 %v283, 0.5
        %v300 = vmul.f32 %v284, 0.5
        %v301 = vmul.f32 %v285, 0.5
        %v302 = vmul.f32 %v286, 0.5
        %v303 = vmul.f32 %v287, 0.5
        %v304 = vmul.f32 %v288, 0.5
        %v305 = vmul.f32 %v289, 0.5
        %v306 = vmul.f32 %v290, 0.5
        %v307 = vmul.f32 %v291, 0.5
        %v308 = vmul.f32 %v292, 0.5
        %v309 = vmul.f32 %v293, 0.5
        %v310 = vmul.f32 %v294, 0.5
        %v311 = vmul.f32 %v295, 0.5
        %v312 = vmul.f32 %v296, 0.5
        %v313 = vmul.f32 %v297, 0.5
        %v314 = vtanh.pop %v298
        %v315 = vtanh.pop %v299
        %v316 = vtanh.pop %v300
        %v317 = vtanh.pop %v301
        %v318 = vtanh.pop %v302
        %v319 = vtanh.pop %v303
        %v320 = vtanh.pop %v304
        %v321 = vtanh.pop %v305
        %v322 = vtanh.pop %v306
        %v323 = vtanh.pop %v307
        %v324 = vtanh.pop %v308
        %v325 = vtanh.pop %v309
        %v326 = vtanh.pop %v310
        %v327 = vtanh.pop %v311
        %v328 = vtanh.pop %v312
        %v329 = vtanh.pop %v313
        %v330 = vmul.f32 %v314, 0.5
        %v331 = vmul.f32 %v315, 0.5
        %v332 = vmul.f32 %v316, 0.5
        %v333 = vmul.f32 %v317, 0.5
        %v334 = vmul.f32 %v318, 0.5
        %v335 = vmul.f32 %v319, 0.5
        %v336 = vmul.f32 %v320, 0.5
        %v337 = vmul.f32 %v321, 0.5
        %v338 = vmul.f32 %v322, 0.5
        %v339 = vmul.f32 %v323, 0.5
        %v340 = vmul.f32 %v324, 0.5
        %v341 = vmul.f32 %v325, 0.5
        %v342 = vmul.f32 %v326, 0.5
        %v343 = vmul.f32 %v327, 0.5
        %v344 = vmul.f32 %v328, 0.5
        %v345 = vmul.f32 %v329, 0.5
        %v346 = vadd.f32 %v330, 0.5
        %v347 = vadd.f32 %v331, 0.5
        %v348 = vadd.f32 %v332, 0.5
        %v349 = vadd.f32 %v333, 0.5
        %v350 = vadd.f32 %v334, 0.5
        %v351 = vadd.f32 %v335, 0.5
        %v352 = vadd.f32 %v336, 0.5
        %v353 = vadd.f32 %v337, 0.5
        %v354 = vadd.f32 %v338, 0.5
        %v355 = vadd.f32 %v339, 0.5
        %v356 = vadd.f32 %v340, 0.5
        %v357 = vadd.f32 %v341, 0.5
        %v358 = vadd.f32 %v342, 0.5
        %v359 = vadd.f32 %v343, 0.5
        %v360 = vadd.f32 %v344, 0.5
        %v361 = vadd.f32 %v345, 0.5
        %s362 = sld [smem:[#allocation2]]
        %v363 = vstv %s362
        %v364 = vmul.f32 %v346, %v363
        %v365 = vmul.f32 %v347, %v363
        %v366 = vmul.f32 %v348, %v363
        %v367 = vmul.f32 %v349, %v363
        %v368 = vmul.f32 %v350, %v363
        %v369 = vmul.f32 %v351, %v363
        %v370 = vmul.f32 %v352, %v363
        %v371 = vmul.f32 %v353, %v363
        %v372 = vmul.f32 %v354, %v363
        %v373 = vmul.f32 %v355, %v363
        %v374 = vmul.f32 %v356, %v363
        %v375 = vmul.f32 %v357, %v363
        %v376 = vmul.f32 %v358, %v363
        %v377 = vmul.f32 %v359, %v363
        %v378 = vmul.f32 %v360, %v363
        %v379 = vmul.f32 %v361, %v363
        %s380 = sld [smem:[#allocation3]]
        %v381 = vstv %s380
        %v382 = vadd.f32 %v364, %v381
        %v383 = vadd.f32 %v365, %v381
        %v384 = vadd.f32 %v366, %v381
        %v385 = vadd.f32 %v367, %v381
        %v386 = vadd.f32 %v368, %v381
        %v387 = vadd.f32 %v369, %v381
        %v388 = vadd.f32 %v370, %v381
        %v389 = vadd.f32 %v371, %v381
        %v390 = vadd.f32 %v372, %v381
        %v391 = vadd.f32 %v373, %v381
        %v392 = vadd.f32 %v374, %v381
        %v393 = vadd.f32 %v375, %v381
        %v394 = vadd.f32 %v376, %v381
        %v395 = vadd.f32 %v377, %v381
        %v396 = vadd.f32 %v378, %v381
        %v397 = vadd.f32 %v379, %v381
        %v398 = vmul.f32 %v382, 0.5
        %v399 = vmul.f32 %v383, 0.5
        %v400 = vmul.f32 %v384, 0.5
        %v401 = vmul.f32 %v385, 0.5
        %v402 = vmul.f32 %v386, 0.5
        %v403 = vmul.f32 %v387, 0.5
        %v404 = vmul.f32 %v388, 0.5
        %v405 = vmul.f32 %v389, 0.5
        %v406 = vmul.f32 %v390, 0.5
        %v407 = vmul.f32 %v391, 0.5
        %v408 = vmul.f32 %v392, 0.5
        %v409 = vmul.f32 %v393, 0.5
        %v410 = vmul.f32 %v394, 0.5
        %v411 = vmul.f32 %v395, 0.5
        %v412 = vmul.f32 %v396, 0.5
        %v413 = vmul.f32 %v397, 0.5
        %v414 = vtanh.pop %v398
        %v415 = vtanh.pop %v399
        %v416 = vtanh.pop %v400
        %v417 = vtanh.pop %v401
        %v418 = vtanh.pop %v402
        %v419 = vtanh.pop %v403
        %v420 = vtanh.pop %v404
        %v421 = vtanh.pop %v405
        %v422 = vtanh.pop %v406
        %v423 = vtanh.pop %v407
        %v424 = vtanh.pop %v408
        %v425 = vtanh.pop %v409
        %v426 = vtanh.pop %v410
        %v427 = vtanh.pop %v411
        %v428 = vtanh.pop %v412
        %v429 = vtanh.pop %v413
        %v430 = vmul.f32 %v414, 0.5
        %v431 = vmul.f32 %v415, 0.5
        %v432 = vmul.f32 %v416, 0.5
        %v433 = vmul.f32 %v417, 0.5
        %v434 = vmul.f32 %v418, 0.5
        %v435 = vmul.f32 %v419, 0.5
        %v436 = vmul.f32 %v420, 0.5
        %v437 = vmul.f32 %v421, 0.5
        %v438 = vmul.f32 %v422, 0.5
        %v439 = vmul.f32 %v423, 0.5
        %v440 = vmul.f32 %v424, 0.5
        %v441 = vmul.f32 %v425, 0.5
        %v442 = vmul.f32 %v426, 0.5
        %v443 = vmul.f32 %v427, 0.5
        %v444 = vmul.f32 %v428, 0.5
        %v445 = vmul.f32 %v429, 0.5
        %v446 = vadd.f32 %v430, 0.5
        %v447 = vadd.f32 %v431, 0.5
        %v448 = vadd.f32 %v432, 0.5
        %v449 = vadd.f32 %v433, 0.5
        %v450 = vadd.f32 %v434, 0.5
        %v451 = vadd.f32 %v435, 0.5
        %v452 = vadd.f32 %v436, 0.5
        %v453 = vadd.f32 %v437, 0.5
        %v454 = vadd.f32 %v438, 0.5
        %v455 = vadd.f32 %v439, 0.5
        %v456 = vadd.f32 %v440, 0.5
        %v457 = vadd.f32 %v441, 0.5
        %v458 = vadd.f32 %v442, 0.5
        %v459 = vadd.f32 %v443, 0.5
        %v460 = vadd.f32 %v444, 0.5
        %v461 = vadd.f32 %v445, 0.5
        %v462 = vld [vmem:[%s3] sm:$0x1]
        %464 = vset.pattern.permute.xlu0 0
        %465 = vperm.xlu0 %464, %v446
        %v466 = vpop.permute.xlu0 %465
        %469 = vset.pattern.permute.xlu0 0
        %470 = vperm.xlu0 %469, %v447
        %v471 = vpop.permute.xlu0 %470
        %474 = vset.pattern.permute.xlu0 0
        %475 = vperm.xlu0 %474, %v448
        %v476 = vpop.permute.xlu0 %475
        %479 = vset.pattern.permute.xlu0 0
        %480 = vperm.xlu0 %479, %v449
        %v481 = vpop.permute.xlu0 %480
        %484 = vset.pattern.permute.xlu0 0
        %485 = vperm.xlu0 %484, %v450
        %v486 = vpop.permute.xlu0 %485
        %489 = vset.pattern.permute.xlu0 0
        %490 = vperm.xlu0 %489, %v451
        %v491 = vpop.permute.xlu0 %490
        %494 = vset.pattern.permute.xlu0 0
        %495 = vperm.xlu0 %494, %v452
        %v496 = vpop.permute.xlu0 %495
        %499 = vset.pattern.permute.xlu0 0
        %500 = vperm.xlu0 %499, %v453
        %v501 = vpop.permute.xlu0 %500
        %504 = vset.pattern.permute.xlu0 0
        %505 = vperm.xlu0 %504, %v454
        %v506 = vpop.permute.xlu0 %505
        %509 = vset.pattern.permute.xlu0 0
        %510 = vperm.xlu0 %509, %v455
        %v511 = vpop.permute.xlu0 %510
        %514 = vset.pattern.permute.xlu0 0
        %515 = vperm.xlu0 %514, %v456
        %v516 = vpop.permute.xlu0 %515
        %519 = vset.pattern.permute.xlu0 0
        %520 = vperm.xlu0 %519, %v457
        %v521 = vpop.permute.xlu0 %520
        %524 = vset.pattern.permute.xlu0 0
        %525 = vperm.xlu0 %524, %v458
        %v526 = vpop.permute.xlu0 %525
        %529 = vset.pattern.permute.xlu0 0
        %530 = vperm.xlu0 %529, %v459
        %v531 = vpop.permute.xlu0 %530
        %534 = vset.pattern.permute.xlu0 0
        %535 = vperm.xlu0 %534, %v460
        %v536 = vpop.permute.xlu0 %535
        %539 = vset.pattern.permute.xlu0 0
        %540 = vperm.xlu0 %539, %v461
        %v541 = vpop.permute.xlu0 %540
        %v544 = vperm.slane %v462, 0
        %v546 = vmul.f32 %v466, %v544
        %v547 = vmul.f32 %v471, %v544
        %v548 = vmul.f32 %v476, %v544
        %v549 = vmul.f32 %v481, %v544
        %v550 = vmul.f32 %v486, %v544
        %v551 = vmul.f32 %v491, %v544
        %v552 = vmul.f32 %v496, %v544
        %v553 = vmul.f32 %v501, %v544
        %v554 = vmul.f32 %v506, %v544
        %v555 = vmul.f32 %v511, %v544
        %v556 = vmul.f32 %v516, %v544
        %v557 = vmul.f32 %v521, %v544
        %v558 = vmul.f32 %v526, %v544
        %v559 = vmul.f32 %v531, %v544
        %v560 = vmul.f32 %v536, %v544
        %v561 = vmul.f32 %v541, %v544
        %v562 = vld [vmem:[%s4] sm:$0x1]
        %v564 = vperm.slane %v562, 0
        %v566 = vadd.f32 %v546, %v564
        %v567 = vadd.f32 %v547, %v564
        %v568 = vadd.f32 %v548, %v564
        %v569 = vadd.f32 %v549, %v564
        %v570 = vadd.f32 %v550, %v564
        %v571 = vadd.f32 %v551, %v564
        %v572 = vadd.f32 %v552, %v564
        %v573 = vadd.f32 %v553, %v564
        %v574 = vadd.f32 %v554, %v564
        %v575 = vadd.f32 %v555, %v564
        %v576 = vadd.f32 %v556, %v564
        %v577 = vadd.f32 %v557, %v564
        %v578 = vadd.f32 %v558, %v564
        %v579 = vadd.f32 %v559, %v564
        %v580 = vadd.f32 %v560, %v564
        %v581 = vadd.f32 %v561, %v564
        %v582 = vmax.f32 %v566, 0.0
        %v583 = vmax.f32 %v567, 0.0
        %v584 = vmax.f32 %v568, 0.0
        %v585 = vmax.f32 %v569, 0.0
        %v586 = vmax.f32 %v570, 0.0
        %v587 = vmax.f32 %v571, 0.0
        %v588 = vmax.f32 %v572, 0.0
        %v589 = vmax.f32 %v573, 0.0
        %v590 = vmax.f32 %v574, 0.0
        %v591 = vmax.f32 %v575, 0.0
        %v592 = vmax.f32 %v576, 0.0
        %v593 = vmax.f32 %v577, 0.0
        %v594 = vmax.f32 %v578, 0.0
        %v595 = vmax.f32 %v579, 0.0
        %v596 = vmax.f32 %v580, 0.0
        %v597 = vmax.f32 %v581, 0.0
        %v598 = vld [vmem:[%s5] sm:$0xff]
        %v599 = vld [vmem:[%s5 + $0x8] sm:$0xff]
        %v600 = vld [vmem:[%s5 + $0x10] sm:$0xff]
        %v601 = vld [vmem:[%s5 + $0x18] sm:$0xff]
        %v602 = vld [vmem:[%s5 + $0x20] sm:$0xff]
        %v603 = vld [vmem:[%s5 + $0x28] sm:$0xff]
        %v604 = vld [vmem:[%s5 + $0x30] sm:$0xff]
        %v605 = vld [vmem:[%s5 + $0x38] sm:$0xff]
        %v606 = vld [vmem:[%s5 + $0x40] sm:$0xff]
        %v607 = vld [vmem:[%s5 + $0x48] sm:$0xff]
        %v608 = vld [vmem:[%s5 + $0x50] sm:$0xff]
        %v609 = vld [vmem:[%s5 + $0x58] sm:$0xff]
        %v610 = vld [vmem:[%s5 + $0x60] sm:$0xff]
        %v611 = vld [vmem:[%s5 + $0x68] sm:$0xff]
        %v612 = vld [vmem:[%s5 + $0x70] sm:$0xff]
        %v613 = vld [vmem:[%s5 + $0x78] sm:$0xff]
        %v614 = vld [vmem:[%s6] sm:$0x1]
        %v616 = vperm.slane %v614, 0
        %618 = vmatpush.msra.mxu0 %v613
        %619 = vmatpush.msra.mxu0 %v612
        %620 = vmatpush.msra.mxu0 %v611
        %621 = vmatpush.msra.mxu0 %v610
        %622 = vmatpush.msra.mxu0 %v609
        %623 = vmatpush.msra.mxu0 %v608
        %624 = vmatpush.msra.mxu0 %v607
        %625 = vmatpush.msra.mxu0 %v606
        %626 = vmatpush.msra.mxu0 %v605
        %627 = vmatpush.msra.mxu0 %v604
        %628 = vmatpush.msra.mxu0 %v603
        %629 = vmatpush.msra.mxu0 %v602
        %630 = vmatpush.msra.mxu0 %v601
        %631 = vmatpush.msra.mxu0 %v600
        %632 = vmatpush.msra.mxu0 %v599
        %633 = vmatpush.msra.mxu0 %v598
        %634 = vmatmul.f32.gmra.mxu0 %v582
        %v635 = vpop.f32.mrf.mxu0
        %v636 = vadd.f32 %v616, %v635
        %637 = vmatmul.f32.gmra.mxu0 %v583
        %v638 = vpop.f32.mrf.mxu0
        %v639 = vadd.f32 %v616, %v638
        %640 = vmatmul.f32.gmra.mxu0 %v584
        %v641 = vpop.f32.mrf.mxu0
        %v642 = vadd.f32 %v616, %v641
        %643 = vmatmul.f32.gmra.mxu0 %v585
        %v644 = vpop.f32.mrf.mxu0
        %v645 = vadd.f32 %v616, %v644
        %646 = vmatmul.f32.gmra.mxu0 %v586
        %v647 = vpop.f32.mrf.mxu0
        %v648 = vadd.f32 %v616, %v647
        %649 = vmatmul.f32.gmra.mxu0 %v587
        %v650 = vpop.f32.mrf.mxu0
        %v651 = vadd.f32 %v616, %v650
        %652 = vmatmul.f32.gmra.mxu0 %v588
        %v653 = vpop.f32.mrf.mxu0
        %v654 = vadd.f32 %v616, %v653
        %655 = vmatmul.f32.gmra.mxu0 %v589
        %v656 = vpop.f32.mrf.mxu0
        %v657 = vadd.f32 %v616, %v656
        %658 = vmatmul.f32.gmra.mxu0 %v590
        %v659 = vpop.f32.mrf.mxu0
        %v660 = vadd.f32 %v616, %v659
        %661 = vmatmul.f32.gmra.mxu0 %v591
        %v662 = vpop.f32.mrf.mxu0
        %v663 = vadd.f32 %v616, %v662
        %664 = vmatmul.f32.gmra.mxu0 %v592
        %v665 = vpop.f32.mrf.mxu0
        %v666 = vadd.f32 %v616, %v665
        %667 = vmatmul.f32.gmra.mxu0 %v593
        %v668 = vpop.f32.mrf.mxu0
        %v669 = vadd.f32 %v616, %v668
        %670 = vmatmul.f32.gmra.mxu0 %v594
        %v671 = vpop.f32.mrf.mxu0
        %v672 = vadd.f32 %v616, %v671
        %673 = vmatmul.f32.gmra.mxu0 %v595
        %v674 = vpop.f32.mrf.mxu0
        %v675 = vadd.f32 %v616, %v674
        %676 = vmatmul.f32.gmra.mxu0 %v596
        %v677 = vpop.f32.mrf.mxu0
        %v678 = vadd.f32 %v616, %v677
        %679 = vmatmul.f32.gmra.mxu0 %v597
        %v680 = vpop.f32.mrf.mxu0
        %v681 = vadd.f32 %v616, %v680
        %682 = vdwg.mxu0
        %683 = vst [vmem:[%s274] sm:$0xff] %v636
        %684 = vst [vmem:[%s274 + $0x8] sm:$0xff] %v639
        %685 = vst [vmem:[%s274 + $0x10] sm:$0xff] %v642
        %686 = vst [vmem:[%s274 + $0x18] sm:$0xff] %v645
        %687 = vst [vmem:[%s274 + $0x20] sm:$0xff] %v648
        %688 = vst [vmem:[%s274 + $0x28] sm:$0xff] %v651
        %689 = vst [vmem:[%s274 + $0x30] sm:$0xff] %v654
        %690 = vst [vmem:[%s274 + $0x38] sm:$0xff] %v657
        %691 = vst [vmem:[%s274 + $0x40] sm:$0xff] %v660
        %692 = vst [vmem:[%s274 + $0x48] sm:$0xff] %v663
        %693 = vst [vmem:[%s274 + $0x50] sm:$0xff] %v666
        %694 = vst [vmem:[%s274 + $0x58] sm:$0xff] %v669
        %695 = vst [vmem:[%s274 + $0x60] sm:$0xff] %v672
        %696 = vst [vmem:[%s274 + $0x68] sm:$0xff] %v675
        %697 = vst [vmem:[%s274 + $0x70] sm:$0xff] %v678
        %698 = vst [vmem:[%s274 + $0x78] sm:$0xff] %v681
        %s699 = sand.u32 %s183, 1
        %s700 = scalar_lea.sflag [#allocation5], %s699
        %s701 = sand.u32 %s183, 1
        %s702 = smul.addr %s701, 128
        %s703 = scalar_lea.vmem [#allocation4], %s702
        // Predicated region
        $region49: #{tpu_custom_call.1} parent=47 // pred_check
          %p704 = pneg %p193
        $region50: #{tpu_custom_call.1} parent=47 // pred_check_branch
          %706 = sbr.rel (%p704) target = $region52
        $region51: #{tpu_custom_call.1} parent=47 // pred_region
          %s707 = smul.u32 16, %s23
          %709 = vsyncadd %s700, 0
          %s710 = smul.addr %s707, 8
          %s711 = scalar_lea.hbm %s7, %s710
          %s712 = sshll.u32 %s703, 4
          %s713 = int_to_ptr.vmem [resolvable:$true] %s712
          %s714 = sshll.u32 %s711, 4
          %s715 = int_to_ptr.hbm [resolvable:$true] %s714
          %720 = dma.vmem_to_hbm [thread:$0]  %s713, 2048, %s715, %s700, 128, 128, 8
        $region52: #{tpu_custom_call.1} parent=47 // pred_fallthru
          _
      $region48: #{tpu_custom_call.1} parent=5 // pred_fallthru
        _
      %p721 = scmp.le.s32.totalorder 2, %s18
      // Predicated region
      $region53: #{tpu_custom_call.1} parent=5 // pred_check
        %p722 = pneg %p721
      $region54: #{tpu_custom_call.1} parent=5 // pred_check_branch
        %724 = sbr.rel (%p722) target = $region56
      $region55: #{tpu_custom_call.1} parent=5 // pred_region
        %s725 = ssub.s32 %s18, 2
        // Predicated region
        $region57: #{tpu_custom_call.1} parent=55 // pred_check
          %p726 = pneg %p199
        $region58: #{tpu_custom_call.1} parent=55 // pred_check_branch
          %728 = sbr.rel (%p726) target = $region60
        $region59: #{tpu_custom_call.1} parent=55 // pred_region
          %s729 = sand.u32 %s184, 1
          %s730 = scalar_lea.sflag [#allocation5], %s729
          %s731 = sand.u32 %s184, 1
          %s732 = smul.addr %s731, 128
          %s733 = scalar_lea.vmem [#allocation4], %s732
          %735 = dma.done %s730, 2048
        $region60: #{tpu_custom_call.1} parent=55 // pred_fallthru
          _
      $region56: #{tpu_custom_call.1} parent=5 // pred_fallthru
        _
    $region6: #{tpu_custom_call.1} parent=1 // loop_footer
      %s22 = sadd.s32 1, %s18
    $region7: #{tpu_custom_call.1} parent=1 // loop_footer_branch
      %17 = sbr.rel target = $region3
    $region8: #{tpu_custom_call.1} parent=1 // loop_exit
      _
    %736 = vsyncpa [#allocation5], 1
    %s737 = scalar_lea.sflag [#allocation5], 1
    %738 = vsyncpa %s737, 1

</llo_original>
